<compile_context>
chip_gen: v6e
topology: v6e:2x2x1
jax: 0.10.0
libtpu: 0.0.40
codegen_flags: <defaults>
</compile_context>

<pallas_src>
import functools
import math

import jax
import jax.numpy as jnp
from jax.experimental import pallas as pl
from jax.experimental.pallas import tpu as pltpu


def _round_up(x, m):
    return ((x + m - 1) // m) * m


def _cdiv(a, b):
    return -(-a // b)


# ---------------------------------------------------------------------------
# Pallas kernel: per-batch-tile body — three lane-dense matmuls + bias + ReLU.
# BN and the whole Chebynet are pre-folded into (u_ref, b0_ref) by the wrapper.
# ---------------------------------------------------------------------------
def dgcnn_kernel(x_ref, u_ref, b0_ref, fc1w_ref, fc1b_ref, fc2w_ref, fc2b_ref,
                 o_ref):
    # Fused BN + Chebynet: (TB, 128) @ (128, 512) + b0, f32 accumulation.
    h = jnp.dot(x_ref[...], u_ref[...],
                preferred_element_type=jnp.float32) + b0_ref[...]
    h = jnp.maximum(h, 0.0).astype(fc1w_ref.dtype)     # fused ReLU + downcast

    # fc1: (TB, 512) @ (512, 128)
    h = jnp.dot(h, fc1w_ref[...],
                preferred_element_type=jnp.float32) + fc1b_ref[...]
    h = jnp.maximum(h, 0.0).astype(fc2w_ref.dtype)

    # fc2: (TB, 128) @ (128, 128)  (lane-padded logits; wrapper slices)
    out = jnp.dot(h, fc2w_ref[...],
                  preferred_element_type=jnp.float32) + fc2b_ref[...]
    o_ref[...] = out.astype(o_ref.dtype)


# ---------------------------------------------------------------------------
# Wrapper: hoisted prep (BN stats, normalize_A, Cheby chain, BN fold, lane
# padding) + batch-gridded pallas_call.
# ---------------------------------------------------------------------------
@functools.partial(jax.jit, static_argnames=("num_layers", "tile_b", "matmul_dtype"))
def dgcnn_forward(x, params, *, num_layers, tile_b=1024,
                  matmul_dtype=jnp.bfloat16):
    B, N, C = x.shape
    H = params["W"].shape[-1]
    HID = params["fc1_w_t"].shape[1]
    num_classes = params["fc2_w_t"].shape[1]
    NC, NH = N * C, N * H

    xf = x.astype(jnp.float32)

    # ---- BatchNorm1d(in_channels), training-mode batch stats over (B, N).
    #      Hoisted to the wrapper so gridding over B cannot change the stats.
    mean = jnp.mean(xf, axis=(0, 1))                               # (C,)
    var = jnp.mean((xf - mean) ** 2, axis=(0, 1))                  # (C,)
    istd = jax.lax.rsqrt(var + 1e-5)
    mean_nc = jnp.broadcast_to(mean, (N, C)).reshape(NC)           # m = n*C + c
    istd_nc = jnp.broadcast_to(istd, (N, C)).reshape(NC)

    # ---- normalize_A (non-symmetric branch): L = D @ relu(A) @ D.
    A = jnp.maximum(params["A"], 0.0)
    d = jnp.sum(A, axis=1)
    dinv = 1.0 / jnp.sqrt(d + 1e-10)
    L = dinv[:, None] * A * dinv[None, :]

    # ---- Chebyshev supports T_0=I, T_1=L, T_i=T_{i-1}@L fused with W_i:
    #      U[(m*C+c), (n*H+h)] = sum_i T_i[n, m] * W_i[c, h]    (shape (70, 448))
    Ts = [jnp.eye(N, dtype=jnp.float32)]
    for i in range(1, num_layers):
        Ts.append(L if i == 1 else Ts[-1] @ L)
    T = jnp.stack(Ts)                                              # (Lyr, N, N)
    U = jnp.einsum('inm,ich->mcnh', T,
                   params["W"].astype(jnp.float32)).reshape(NC, NH)

    # ---- Fold BN into U:  (x - mean)*istd @ U  ==  x @ U_eff + b0.
    #      Row r of U/mean_nc/istd_nc all use the same (n-major, c-minor)
    #      flattening r = n*C + c, matching x.reshape(B, NC).
    U_eff = istd_nc[:, None] * U                                   # (NC, NH)
    b0 = -(mean_nc * istd_nc) @ U                                  # (NH,)

    # ---- Lane-dense zero padding of every contraction / output dim.
    K_PAD = _round_up(NC, 128)            # 70  -> 128
    NH_PAD = _round_up(NH, 128)           # 448 -> 512
    HID_PAD = _round_up(HID, 128)         # 64  -> 128
    OUT_PAD = _round_up(num_classes, 128) # 2   -> 128

    U_p = jnp.zeros((K_PAD, NH_PAD), jnp.float32).at[:NC, :NH].set(U_eff)
    b0_p = jnp.zeros((1, NH_PAD), jnp.float32).at[0, :NH].set(b0)
    fc1w_p = jnp.zeros((NH_PAD, HID_PAD), jnp.float32
                       ).at[:NH, :HID].set(params["fc1_w_t"])
    fc1b_p = jnp.zeros((1, HID_PAD), jnp.float32
                       ).at[0, :HID].set(params["fc1_b"].reshape(-1))
    fc2w_p = jnp.zeros((HID_PAD, OUT_PAD), jnp.float32
                       ).at[:HID, :num_classes].set(params["fc2_w_t"])
    fc2b_p = jnp.zeros((1, OUT_PAD), jnp.float32
                       ).at[0, :num_classes].set(params["fc2_b"].reshape(-1))

    # matmul operands in matmul_dtype (f32 accumulation inside the kernel).
    U_m = U_p.astype(matmul_dtype)
    fc1w_m = fc1w_p.astype(matmul_dtype)
    fc2w_m = fc2w_p.astype(matmul_dtype)

    # ---- Batch tiling: >= 2 grid steps (v7x dual TC), minimal batch padding.
    n_tiles = max(2, _cdiv(B, tile_b))
    tb = max(8, _round_up(_cdiv(B, n_tiles), 8))   # sublane-aligned tile rows
    B_pad = n_tiles * tb

    x_pad = jnp.zeros((B_pad, K_PAD), dtype=matmul_dtype)
    x_pad = x_pad.at[:B, :NC].set(xf.reshape(B, NC).astype(matmul_dtype))

    # ---- VMEM budget: double-buffered x/out tiles + (default double-buffered)
    #      invariant weights + largest f32 intermediate + headroom.
    it = jnp.dtype(matmul_dtype).itemsize
    weight_bytes = ((K_PAD * NH_PAD + NH_PAD * HID_PAD + HID_PAD * OUT_PAD) * it
                    + (NH_PAD + HID_PAD + OUT_PAD) * 4)
    vmem_bytes = (2 * tb * K_PAD * it          # x tile, double-buffered
                  + 2 * tb * OUT_PAD * 4       # out tile, double-buffered
                  + 2 * weight_bytes           # grid-invariant operands
                  + tb * NH_PAD * 4            # largest f32 intermediate
                  + (8 << 20))                 # compiler scratch headroom
    vmem_bytes = int(min(max(vmem_bytes, 16 << 20), 40 << 20))

    full = lambda shape: pl.BlockSpec(shape, lambda i: (0, 0))
    out = pl.pallas_call(
        dgcnn_kernel,
        out_shape=jax.ShapeDtypeStruct((B_pad, OUT_PAD), jnp.float32),
        grid_spec=pltpu.PrefetchScalarGridSpec(
            num_scalar_prefetch=0,
            grid=(n_tiles,),
            in_specs=[
                pl.BlockSpec((tb, K_PAD), lambda i: (i, 0)),   # x tile
                full((K_PAD, NH_PAD)),                         # BN-folded Cheby op
                full((1, NH_PAD)),                             # BN-folded bias
                full((NH_PAD, HID_PAD)),                       # fc1 weight (pre-T)
                full((1, HID_PAD)),                            # fc1 bias
                full((HID_PAD, OUT_PAD)),                      # fc2 weight (pre-T)
                full((1, OUT_PAD)),                            # fc2 bias
            ],
            out_specs=pl.BlockSpec((tb, OUT_PAD), lambda i: (i, 0)),
        ),
        compiler_params=pltpu.CompilerParams(
            dimension_semantics=("parallel",),
            vmem_limit_bytes=vmem_bytes,
        ),
    )(x_pad, U_m, b0_p, fc1w_m, fc1b_p, fc2w_m, fc2b_p)
    return out[:B, :num_classes]


# ---------------------------------------------------------------------------
# Deterministic parameter init (xavier-normal weights, zero biases)
# ---------------------------------------------------------------------------
def xavier_normal(key, shape):
    std = (2.0 / (shape[0] + shape[1])) ** 0.5
    return std * jax.random.normal(key, shape, dtype=jnp.float32)


def init_params(key, *, in_channels, num_electrodes, num_layers,
                hid_channels, num_classes):
    keys = jax.random.split(key, num_layers + 3)
    W = jnp.stack([xavier_normal(keys[i], (in_channels, hid_channels))
                   for i in range(num_layers)])                    # (Lyr, C, H)
    fc1_w = xavier_normal(keys[num_layers], (64, num_electrodes * hid_channels))
    fc2_w = xavier_normal(keys[num_layers + 1], (num_classes, 64))
    A = xavier_normal(keys[num_layers + 2], (num_electrodes, num_electrodes))
    return {
        "A": A,
        "W": W,
        "fc1_w_t": fc1_w.T,                       # (N*H, 64)
        "fc1_b": jnp.zeros((1, 64), jnp.float32),
        "fc2_w_t": fc2_w.T,                       # (64, num_classes)
        "fc2_b": jnp.zeros((1, num_classes), jnp.float32),
    }


# ---------------------------------------------------------------------------
# Pure-JAX reference (mirrors the PyTorch forward, un-fused) for verification
# ---------------------------------------------------------------------------
def dgcnn_reference(x, params, *, num_layers):
    x = x.astype(jnp.float32)
    mean = jnp.mean(x, axis=(0, 1), keepdims=True)
    var = jnp.mean((x - mean) ** 2, axis=(0, 1), keepdims=True)
    x = (x - mean) / jnp.sqrt(var + 1e-5)

    A = jnp.maximum(params["A"], 0.0)
    d = jnp.sum(A, axis=1)
    dinv = 1.0 / jnp.sqrt(d + 1e-10)
    L = dinv[:, None] * A * dinv[None, :]

    N = A.shape[0]
    supports = []
    for i in range(num_layers):
        if i == 0:
            supports.append(jnp.eye(N, dtype=jnp.float32))
        elif i == 1:
            supports.append(L)
        else:
            supports.append(supports[-1] @ L)

    res = None
    for i in range(num_layers):
        t = jnp.einsum('nm,bmc->bnc', supports[i], x) @ params["W"][i]
        res = t if res is None else res + t
    res = jnp.maximum(res, 0.0)                        # (B, N, H)

    B = x.shape[0]
    flat = res.reshape(B, -1)
    h = jnp.maximum(flat @ params["fc1_w_t"] + params["fc1_b"], 0.0)
    return h @ params["fc2_w_t"] + params["fc2_b"]


# ---------------------------------------------------------------------------
if __name__ == "__main__":
    # DGCNN defaults: in_channels=5, num_electrodes=14, num_layers=2,
    # hid_channels=32, num_classes=2; small batch for the correctness run.
    B, C, N, LAYERS, H, NUM_CLASSES = 2, 5, 14, 2, 32, 2

    key = jax.random.PRNGKey(0)
    k_x, k_p = jax.random.split(key)
    x = jax.random.normal(k_x, (B, N, C), dtype=jnp.float32)
    params = init_params(k_p, in_channels=C, num_electrodes=N,
                         num_layers=LAYERS, hid_channels=H,
                         num_classes=NUM_CLASSES)

    ref = dgcnn_reference(x, params, num_layers=LAYERS)

    # f32 matmul path: tight correctness check against the un-fused reference.
    out = dgcnn_forward(x, params, num_layers=LAYERS, tile_b=1024,
                        matmul_dtype=jnp.float32)
    out = jax.block_until_ready(out)
    assert out.shape == (B, NUM_CLASSES)
    assert jnp.allclose(out, ref, atol=1e-4, rtol=1e-4), (out, ref)

    # bf16 matmul path (default; recommended on v5e/v6e/v7x): loose tolerance.
    out_bf16 = dgcnn_forward(x, params, num_layers=LAYERS, tile_b=1024,
                             matmul_dtype=jnp.bfloat16)
    out_bf16 = jax.block_until_ready(out_bf16)
    assert out_bf16.shape == (B, NUM_CLASSES)
    assert jnp.allclose(out_bf16, ref, atol=0.1, rtol=0.1), (out_bf16, ref)

    print("KERNEL_OK")
</pallas_src>

<mosaic_0001>
module attributes {stable_mosaic.version = 11 : i64} {
  func.func @dgcnn_kernel(%arg0: i32, %arg1: memref<8x128xf32, #tpu.memory_space<vmem>>, %arg2: memref<128x512xf32, #tpu.memory_space<vmem>>, %arg3: memref<1x512xf32, #tpu.memory_space<vmem>>, %arg4: memref<512x128xf32, #tpu.memory_space<vmem>>, %arg5: memref<1x128xf32, #tpu.memory_space<vmem>>, %arg6: memref<128x128xf32, #tpu.memory_space<vmem>>, %arg7: memref<1x128xf32, #tpu.memory_space<vmem>>, %arg8: memref<8x128xf32, #tpu.memory_space<vmem>>) attributes {dimension_semantics = [#tpu.dimension_semantics<parallel>], iteration_bounds = array<i64: 2>, scalar_prefetch = 0 : i64, scratch_operands = 0 : i64, tpu.core_type = #tpu.core_type<tc>, window_params = [{transform_indices = @transform_0, window_bounds = array<i64: 8, 128>}, {pipeline_mode = #tpu.pipeline_mode<synchronous>, transform_indices = @transform_1, window_bounds = array<i64: 128, 512>}, {pipeline_mode = #tpu.pipeline_mode<synchronous>, transform_indices = @transform_2, window_bounds = array<i64: 1, 512>}, {pipeline_mode = #tpu.pipeline_mode<synchronous>, transform_indices = @transform_3, window_bounds = array<i64: 512, 128>}, {pipeline_mode = #tpu.pipeline_mode<synchronous>, transform_indices = @transform_4, window_bounds = array<i64: 1, 128>}, {pipeline_mode = #tpu.pipeline_mode<synchronous>, transform_indices = @transform_5, window_bounds = array<i64: 128, 128>}, {pipeline_mode = #tpu.pipeline_mode<synchronous>, transform_indices = @transform_6, window_bounds = array<i64: 1, 128>}, {transform_indices = @transform_7, window_bounds = array<i64: 8, 128>}]} {
    %c0 = arith.constant 0 : index
    %c0_0 = arith.constant 0 : index
    %0 = vector.load %arg1[%c0, %c0_0] : memref<8x128xf32, #tpu.memory_space<vmem>>, vector<8x128xf32>
    %c0_1 = arith.constant 0 : index
    %c0_2 = arith.constant 0 : index
    %1 = vector.load %arg2[%c0_1, %c0_2] : memref<128x512xf32, #tpu.memory_space<vmem>>, vector<128x512xf32>
    %cst = arith.constant dense<0.000000e+00> : vector<8x512xf32>
    %2 = tpu.matmul %0, %1, %cst {dimension_numbers = #tpu.dot_dimension_numbers<[1], [0], [0], [1], [0, 0, 1, 1], [], []>} : vector<8x128xf32>, vector<128x512xf32>, vector<8x512xf32> -> vector<8x512xf32>
    %c0_3 = arith.constant 0 : index
    %c0_4 = arith.constant 0 : index
    %3 = vector.load %arg3[%c0_3, %c0_4] : memref<1x512xf32, #tpu.memory_space<vmem>>, vector<1x512xf32>
    %4 = vector.broadcast %3 : vector<1x512xf32> to vector<8x512xf32>
    %5 = arith.addf %2, %4 : vector<8x512xf32>
    %cst_5 = arith.constant 0.000000e+00 : f32
    %6 = vector.broadcast %cst_5 : f32 to vector<8x512xf32>
    %7 = arith.maximumf %5, %6 : vector<8x512xf32>
    %c0_6 = arith.constant 0 : index
    %c0_7 = arith.constant 0 : index
    %8 = vector.load %arg4[%c0_6, %c0_7] : memref<512x128xf32, #tpu.memory_space<vmem>>, vector<512x128xf32>
    %cst_8 = arith.constant dense<0.000000e+00> : vector<8x128xf32>
    %9 = tpu.matmul %7, %8, %cst_8 {dimension_numbers = #tpu.dot_dimension_numbers<[1], [0], [0], [1], [0, 0, 1, 1], [], []>} : vector<8x512xf32>, vector<512x128xf32>, vector<8x128xf32> -> vector<8x128xf32>
    %c0_9 = arith.constant 0 : index
    %c0_10 = arith.constant 0 : index
    %10 = vector.load %arg5[%c0_9, %c0_10] : memref<1x128xf32, #tpu.memory_space<vmem>>, vector<1x128xf32>
    %11 = vector.broadcast %10 : vector<1x128xf32> to vector<8x128xf32>
    %12 = arith.addf %9, %11 : vector<8x128xf32>
    %cst_11 = arith.constant 0.000000e+00 : f32
    %13 = vector.broadcast %cst_11 : f32 to vector<8x128xf32>
    %14 = arith.maximumf %12, %13 : vector<8x128xf32>
    %c0_12 = arith.constant 0 : index
    %c0_13 = arith.constant 0 : index
    %15 = vector.load %arg6[%c0_12, %c0_13] : memref<128x128xf32, #tpu.memory_space<vmem>>, vector<128x128xf32>
    %cst_14 = arith.constant dense<0.000000e+00> : vector<8x128xf32>
    %16 = tpu.matmul %14, %15, %cst_14 {dimension_numbers = #tpu.dot_dimension_numbers<[1], [0], [0], [1], [0, 0, 1, 1], [], []>} : vector<8x128xf32>, vector<128x128xf32>, vector<8x128xf32> -> vector<8x128xf32>
    %c0_15 = arith.constant 0 : index
    %c0_16 = arith.constant 0 : index
    %17 = vector.load %arg7[%c0_15, %c0_16] : memref<1x128xf32, #tpu.memory_space<vmem>>, vector<1x128xf32>
    %18 = vector.broadcast %17 : vector<1x128xf32> to vector<8x128xf32>
    %19 = arith.addf %16, %18 : vector<8x128xf32>
    %c0_17 = arith.constant 0 : index
    %c0_18 = arith.constant 0 : index
    %20 = vector.load %arg8[%c0_17, %c0_18] : memref<8x128xf32, #tpu.memory_space<vmem>>, vector<8x128xf32>
    tpu.vector_store %arg8[%c0_17, %c0_18], %19 {strides = array<i32>} : memref<8x128xf32, #tpu.memory_space<vmem>>, vector<8x128xf32>,
    return
  }
  func.func @transform_0(%arg0: i32) -> (i32, i32) {
    %c0_i32 = arith.constant 0 : i32
    %c0_i32_0 = arith.constant 0 : i32
    return %arg0, %c0_i32 : i32, i32
  }
  func.func @transform_1(%arg0: i32) -> (i32, i32) {
    %c0_i32 = arith.constant 0 : i32
    %c0_i32_0 = arith.constant 0 : i32
    %c0_i32_1 = arith.constant 0 : i32
    return %c0_i32, %c0_i32_0 : i32, i32
  }
  func.func @transform_2(%arg0: i32) -> (i32, i32) {
    %c0_i32 = arith.constant 0 : i32
    %c0_i32_0 = arith.constant 0 : i32
    %c0_i32_1 = arith.constant 0 : i32
    return %c0_i32, %c0_i32_0 : i32, i32
  }
  func.func @transform_3(%arg0: i32) -> (i32, i32) {
    %c0_i32 = arith.constant 0 : i32
    %c0_i32_0 = arith.constant 0 : i32
    %c0_i32_1 = arith.constant 0 : i32
    return %c0_i32, %c0_i32_0 : i32, i32
  }
  func.func @transform_4(%arg0: i32) -> (i32, i32) {
    %c0_i32 = arith.constant 0 : i32
    %c0_i32_0 = arith.constant 0 : i32
    %c0_i32_1 = arith.constant 0 : i32
    return %c0_i32, %c0_i32_0 : i32, i32
  }
  func.func @transform_5(%arg0: i32) -> (i32, i32) {
    %c0_i32 = arith.constant 0 : i32
    %c0_i32_0 = arith.constant 0 : i32
    %c0_i32_1 = arith.constant 0 : i32
    return %c0_i32, %c0_i32_0 : i32, i32
  }
  func.func @transform_6(%arg0: i32) -> (i32, i32) {
    %c0_i32 = arith.constant 0 : i32
    %c0_i32_0 = arith.constant 0 : i32
    %c0_i32_1 = arith.constant 0 : i32
    return %c0_i32, %c0_i32_0 : i32, i32
  }
  func.func @transform_7(%arg0: i32) -> (i32, i32) {
    %c0_i32 = arith.constant 0 : i32
    %c0_i32_0 = arith.constant 0 : i32
    return %arg0, %c0_i32 : i32, i32
  }
}

</mosaic_0001>

<llo_original>
// kernel: mul.22
$region0: #{mul.22}
  %s0 = inlined_call_operand.vmem [shape: f32[14,5], index: 0, kind: input, shape index: {}]
  %s1 = inlined_call_operand.vmem [shape: f32[70], index: 1, kind: output, shape index: {}]
  $region1: #{mul.22} parent=0
    #allocation0 [shape = 'u8[4096]{0}', space=vmem, size = 0x1000, scoped, tag = 'scoped mem for output reshape']
    %v2 = vld [vmem:[%s0] sm:$0x1]
    %vm3 = vcmask 39936
    %4 = vst.msk [vmem:[#allocation0] sm:$0x1] %vm3, %v2
    %s5 = scalar_lea.vmem %s0, 13
    %v6 = vld [vmem:[%s5] sm:$0x1]
    %7 = vrot.lane.b32.xlu0 %v6, 65
    %v8 = vpop.permute.xlu0 %7
    %vm9 = vcmask 572936
    %10 = vst.msk [vmem:[#allocation0] sm:$0x1] %vm9, %v8
    %s11 = scalar_lea.vmem %s0, 12
    %v12 = vld [vmem:[%s11] sm:$0x1]
    %13 = vrot.lane.b32.xlu0 %v12, 60
    %v14 = vpop.permute.xlu0 %13
    %vm15 = vcmask 531936
    %16 = vst.msk [vmem:[#allocation0] sm:$0x1] %vm15, %v14
    %s17 = scalar_lea.vmem %s0, 11
    %v18 = vld [vmem:[%s17] sm:$0x1]
    %19 = vrot.lane.b32.xlu0 %v18, 55
    %v20 = vpop.permute.xlu0 %19
    %vm21 = vcmask 490936
    %22 = vst.msk [vmem:[#allocation0] sm:$0x1] %vm21, %v20
    %s23 = scalar_lea.vmem %s0, 10
    %v24 = vld [vmem:[%s23] sm:$0x1]
    %25 = vrot.lane.b32.xlu0 %v24, 50
    %v26 = vpop.permute.xlu0 %25
    %vm27 = vcmask 449936
    %28 = vst.msk [vmem:[#allocation0] sm:$0x1] %vm27, %v26
    %s29 = scalar_lea.vmem %s0, 9
    %v30 = vld [vmem:[%s29] sm:$0x1]
    %31 = vrot.lane.b32.xlu0 %v30, 45
    %v32 = vpop.permute.xlu0 %31
    %vm33 = vcmask 408936
    %34 = vst.msk [vmem:[#allocation0] sm:$0x1] %vm33, %v32
    %s35 = scalar_lea.vmem %s0, 8
    %v36 = vld [vmem:[%s35] sm:$0x1]
    %37 = vrot.lane.b32.xlu0 %v36, 40
    %v38 = vpop.permute.xlu0 %37
    %vm39 = vcmask 367936
    %40 = vst.msk [vmem:[#allocation0] sm:$0x1] %vm39, %v38
    %s41 = scalar_lea.vmem %s0, 7
    %v42 = vld [vmem:[%s41] sm:$0x1]
    %43 = vrot.lane.b32.xlu0 %v42, 35
    %v44 = vpop.permute.xlu0 %43
    %vm45 = vcmask 326936
    %46 = vst.msk [vmem:[#allocation0] sm:$0x1] %vm45, %v44
    %s47 = scalar_lea.vmem %s0, 6
    %v48 = vld [vmem:[%s47] sm:$0x1]
    %49 = vrot.lane.b32.xlu0 %v48, 30
    %v50 = vpop.permute.xlu0 %49
    %vm51 = vcmask 285936
    %52 = vst.msk [vmem:[#allocation0] sm:$0x1] %vm51, %v50
    %s53 = scalar_lea.vmem %s0, 5
    %v54 = vld [vmem:[%s53] sm:$0x1]
    %55 = vrot.lane.b32.xlu0 %v54, 25
    %v56 = vpop.permute.xlu0 %55
    %vm57 = vcmask 244936
    %58 = vst.msk [vmem:[#allocation0] sm:$0x1] %vm57, %v56
    %s59 = scalar_lea.vmem %s0, 4
    %v60 = vld [vmem:[%s59] sm:$0x1]
    %61 = vrot.lane.b32.xlu0 %v60, 20
    %v62 = vpop.permute.xlu0 %61
    %vm63 = vcmask 203936
    %64 = vst.msk [vmem:[#allocation0] sm:$0x1] %vm63, %v62
    %s65 = scalar_lea.vmem %s0, 3
    %v66 = vld [vmem:[%s65] sm:$0x1]
    %67 = vrot.lane.b32.xlu0 %v66, 15
    %v68 = vpop.permute.xlu0 %67
    %vm69 = vcmask 162936
    %70 = vst.msk [vmem:[#allocation0] sm:$0x1] %vm69, %v68
    %s71 = scalar_lea.vmem %s0, 2
    %v72 = vld [vmem:[%s71] sm:$0x1]
    %73 = vrot.lane.b32.xlu0 %v72, 10
    %v74 = vpop.permute.xlu0 %73
    %vm75 = vcmask 121936
    %76 = vst.msk [vmem:[#allocation0] sm:$0x1] %vm75, %v74
    %s77 = scalar_lea.vmem %s0, 1
    %v78 = vld [vmem:[%s77] sm:$0x1]
    %79 = vrot.lane.b32.xlu0 %v78, 5
    %v80 = vpop.permute.xlu0 %79
    %vm81 = vcmask 80936
    %82 = vst.msk [vmem:[#allocation0] sm:$0x1] %vm81, %v80
    %s84 = sshll.u32 1, 1
    %s85 = ssub.s32 %s84, 1
    %v87 = vld [vmem:[#allocation0] sm:%s85]
    %s88 = sshll.u32 1, 1
    %s89 = ssub.s32 %s88, 1
    %90 = vst [vmem:[%s1] sm:%s89] %v87

// kernel: dgcnn_forward.1
$region0: #{dgcnn_forward.1}
  #allocation0 [shape = 'u32[]', space=smem, size = 0x4, offset = 0x4, fixed_abs, tag = 'smem constant byte address 0x4 - core index']
  #allocation1 [shape = 'u32[144,128]{1,0:T(1,128)}', space=vmem, size = 0x12000, scoped, tag = 'internal scratch']
  %s0 = inlined_call_operand.vmem [shape: f32[16,128], index: 0, kind: input, shape index: {}]
  %s1 = inlined_call_operand.vmem [shape: f32[128,512], index: 1, kind: input, shape index: {}]
  %s2 = inlined_call_operand.vmem [shape: f32[1,512], index: 2, kind: input, shape index: {}]
  %s3 = inlined_call_operand.vmem [shape: f32[512,128], index: 3, kind: input, shape index: {}]
  %s4 = inlined_call_operand.vmem [shape: f32[1,128], index: 4, kind: input, shape index: {}]
  %s5 = inlined_call_operand.vmem [shape: f32[128,128], index: 5, kind: input, shape index: {}]
  %s6 = inlined_call_operand.vmem [shape: f32[1,128], index: 6, kind: input, shape index: {}]
  %s7 = inlined_call_operand.vmem [shape: f32[16,128], index: 7, kind: output, shape index: {}]
  %s8 = sld [smem:[#allocation0]]
  $region61: #{dgcnn_forward.1} parent=0
    _
  %s10 = ssub.s32 1, %s8
  %s11 = scalar_select 0, %s10, %s8
  loop: start=0, step=1, limit=4
  $region2: #{dgcnn_forward.1} parent=0 // loop_pre_header
    _
  $region3: #{dgcnn_forward.1} parent=0 // loop_header
    %s13 = sphi 0, %s17
    %p14 = scmp.ge.s32.totalorder %s13, 4
    %s23 = sphi 0, %s25
    %s26 = sphi 0, %s23
    %s27 = sphi 0, %s26
    %s43 = sphi 0, %s27
    %s47 = sphi 0, %s47
    %s49 = sphi 0, %s47
    %s50 = sphi 0, %s49
    %s64 = sphi 0, %s50
    %s68 = sphi 0, %s68
    %s70 = sphi 0, %s68
    %s71 = sphi 0, %s70
    %s85 = sphi 0, %s71
    %s89 = sphi 0, %s89
    %s91 = sphi 0, %s89
    %s92 = sphi 0, %s91
    %s106 = sphi 0, %s92
    %s110 = sphi 0, %s110
    %s112 = sphi 0, %s110
    %s113 = sphi 0, %s112
    %s127 = sphi 0, %s113
    %s131 = sphi 0, %s131
    %s133 = sphi 0, %s131
    %s134 = sphi 0, %s133
    %s148 = sphi 0, %s134
    %s152 = sphi 0, %s152
    %s154 = sphi 0, %s152
    %s155 = sphi 0, %s154
    %s169 = sphi 0, %s155
    %s175 = sphi 0, %s177
    %s178 = sphi 0, %s175
    %s179 = sphi 0, %s178
    %s195 = sphi 0, %s179
  $region4: #{dgcnn_forward.1} parent=0 // loop_header_branch
    %16 = sbr.rel (%p14) target = $region8
  $region5: #{dgcnn_forward.1} parent=0 // loop_body
    %s18 = ssub.s32 %s13, 1
    %s19 = ssub.s32 %s13, 2
    %s20 = sadd.s32 %s13, 1
    %s21 = ssub.s32 %s13, %s20
    %p22 = scmp.eq.s32.totalorder %s21, 0
    %s24 = sadd.s32 %s23, 1
    %s25 = scalar_select %p22, %s23, %s24
    %p28 = pneg %p22
    %p29 = scmp.eq.s32.totalorder %s13, 1
    %p30 = por %p28, %p29
    %p31 = scmp.ne.s32.totalorder %s23, %s26
    %p32 = scmp.eq.s32.totalorder %s13, 0
    %p33 = por %p31, %p32
    %p34 = scmp.ne.s32.totalorder %s23, %s26
    %p35 = scmp.eq.s32.totalorder %s18, 1
    %p36 = por %p34, %p35
    %p37 = scmp.ne.s32.totalorder %s26, %s27
    %p38 = scmp.eq.s32.totalorder %s18, 0
    %p39 = por %p37, %p38
    %p40 = scmp.ne.s32.totalorder %s26, %s27
    %p41 = scmp.eq.s32.totalorder %s19, 1
    %p42 = por %p40, %p41
    %p44 = scmp.ne.s32.totalorder %s27, %s43
    %p45 = scmp.eq.s32.totalorder %s19, 0
    %p46 = por %p44, %p45
    %s48 = sadd.s32 %s47, 1
    %p51 = scmp.eq.s32.totalorder %s13, 1
    %p52 = scmp.ne.s32.totalorder %s47, %s49
    %p53 = scmp.eq.s32.totalorder %s13, 0
    %p54 = por %p52, %p53
    %p55 = scmp.ne.s32.totalorder %s47, %s49
    %p56 = scmp.eq.s32.totalorder %s18, 1
    %p57 = por %p55, %p56
    %p58 = scmp.ne.s32.totalorder %s49, %s50
    %p59 = scmp.eq.s32.totalorder %s18, 0
    %p60 = por %p58, %p59
    %p61 = scmp.ne.s32.totalorder %s49, %s50
    %p62 = scmp.eq.s32.totalorder %s19, 1
    %p63 = por %p61, %p62
    %p65 = scmp.ne.s32.totalorder %s50, %s64
    %p66 = scmp.eq.s32.totalorder %s19, 0
    %p67 = por %p65, %p66
    %s69 = sadd.s32 %s68, 1
    %p72 = scmp.eq.s32.totalorder %s13, 1
    %p73 = scmp.ne.s32.totalorder %s68, %s70
    %p74 = scmp.eq.s32.totalorder %s13, 0
    %p75 = por %p73, %p74
    %p76 = scmp.ne.s32.totalorder %s68, %s70
    %p77 = scmp.eq.s32.totalorder %s18, 1
    %p78 = por %p76, %p77
    %p79 = scmp.ne.s32.totalorder %s70, %s71
    %p80 = scmp.eq.s32.totalorder %s18, 0
    %p81 = por %p79, %p80
    %p82 = scmp.ne.s32.totalorder %s70, %s71
    %p83 = scmp.eq.s32.totalorder %s19, 1
    %p84 = por %p82, %p83
    %p86 = scmp.ne.s32.totalorder %s71, %s85
    %p87 = scmp.eq.s32.totalorder %s19, 0
    %p88 = por %p86, %p87
    %s90 = sadd.s32 %s89, 1
    %p93 = scmp.eq.s32.totalorder %s13, 1
    %p94 = scmp.ne.s32.totalorder %s89, %s91
    %p95 = scmp.eq.s32.totalorder %s13, 0
    %p96 = por %p94, %p95
    %p97 = scmp.ne.s32.totalorder %s89, %s91
    %p98 = scmp.eq.s32.totalorder %s18, 1
    %p99 = por %p97, %p98
    %p100 = scmp.ne.s32.totalorder %s91, %s92
    %p101 = scmp.eq.s32.totalorder %s18, 0
    %p102 = por %p100, %p101
    %p103 = scmp.ne.s32.totalorder %s91, %s92
    %p104 = scmp.eq.s32.totalorder %s19, 1
    %p105 = por %p103, %p104
    %p107 = scmp.ne.s32.totalorder %s92, %s106
    %p108 = scmp.eq.s32.totalorder %s19, 0
    %p109 = por %p107, %p108
    %s111 = sadd.s32 %s110, 1
    %p114 = scmp.eq.s32.totalorder %s13, 1
    %p115 = scmp.ne.s32.totalorder %s110, %s112
    %p116 = scmp.eq.s32.totalorder %s13, 0
    %p117 = por %p115, %p116
    %p118 = scmp.ne.s32.totalorder %s110, %s112
    %p119 = scmp.eq.s32.totalorder %s18, 1
    %p120 = por %p118, %p119
    %p121 = scmp.ne.s32.totalorder %s112, %s113
    %p122 = scmp.eq.s32.totalorder %s18, 0
    %p123 = por %p121, %p122
    %p124 = scmp.ne.s32.totalorder %s112, %s113
    %p125 = scmp.eq.s32.totalorder %s19, 1
    %p126 = por %p124, %p125
    %p128 = scmp.ne.s32.totalorder %s113, %s127
    %p129 = scmp.eq.s32.totalorder %s19, 0
    %p130 = por %p128, %p129
    %s132 = sadd.s32 %s131, 1
    %p135 = scmp.eq.s32.totalorder %s13, 1
    %p136 = scmp.ne.s32.totalorder %s131, %s133
    %p137 = scmp.eq.s32.totalorder %s13, 0
    %p138 = por %p136, %p137
    %p139 = scmp.ne.s32.totalorder %s131, %s133
    %p140 = scmp.eq.s32.totalorder %s18, 1
    %p141 = por %p139, %p140
    %p142 = scmp.ne.s32.totalorder %s133, %s134
    %p143 = scmp.eq.s32.totalorder %s18, 0
    %p144 = por %p142, %p143
    %p145 = scmp.ne.s32.totalorder %s133, %s134
    %p146 = scmp.eq.s32.totalorder %s19, 1
    %p147 = por %p145, %p146
    %p149 = scmp.ne.s32.totalorder %s134, %s148
    %p150 = scmp.eq.s32.totalorder %s19, 0
    %p151 = por %p149, %p150
    %s153 = sadd.s32 %s152, 1
    %p156 = scmp.eq.s32.totalorder %s13, 1
    %p157 = scmp.ne.s32.totalorder %s152, %s154
    %p158 = scmp.eq.s32.totalorder %s13, 0
    %p159 = por %p157, %p158
    %p160 = scmp.ne.s32.totalorder %s152, %s154
    %p161 = scmp.eq.s32.totalorder %s18, 1
    %p162 = por %p160, %p161
    %p163 = scmp.ne.s32.totalorder %s154, %s155
    %p164 = scmp.eq.s32.totalorder %s18, 0
    %p165 = por %p163, %p164
    %p166 = scmp.ne.s32.totalorder %s154, %s155
    %p167 = scmp.eq.s32.totalorder %s19, 1
    %p168 = por %p166, %p167
    %p170 = scmp.ne.s32.totalorder %s155, %s169
    %p171 = scmp.eq.s32.totalorder %s19, 0
    %p172 = por %p170, %p171
    %s173 = ssub.s32 %s13, %s20
    %p174 = scmp.eq.s32.totalorder %s173, 0
    %s176 = sadd.s32 %s175, 1
    %s177 = scalar_select %p174, %s175, %s176
    %p180 = pneg %p174
    %p181 = scmp.eq.s32.totalorder %s13, 1
    %p182 = por %p180, %p181
    %p183 = scmp.ne.s32.totalorder %s175, %s178
    %p184 = scmp.eq.s32.totalorder %s13, 0
    %p185 = por %p183, %p184
    %p186 = scmp.ne.s32.totalorder %s175, %s178
    %p187 = scmp.eq.s32.totalorder %s18, 1
    %p188 = por %p186, %p187
    %p189 = scmp.ne.s32.totalorder %s178, %s179
    %p190 = scmp.eq.s32.totalorder %s18, 0
    %p191 = por %p189, %p190
    %p192 = scmp.ne.s32.totalorder %s178, %s179
    %p193 = scmp.eq.s32.totalorder %s19, 1
    %p194 = por %p192, %p193
    %p196 = scmp.ne.s32.totalorder %s179, %s195
    %p197 = scmp.eq.s32.totalorder %s19, 0
    %p198 = por %p196, %p197
    %p199 = scmp.le.s32.totalorder 1, %s13
    %p200 = scmp.lt.s32.totalorder %s13, 3
    %p201 = pnand %p199, %p200
    %p202 = pneg %p201
    // Predicated region
    $region9: #{dgcnn_forward.1} parent=5 // pred_check
      _
    $region10: #{dgcnn_forward.1} parent=5 // pred_check_branch
      %204 = sbr.rel (%p201) target = $region12
    $region11: #{dgcnn_forward.1} parent=5 // pred_region
      %s205 = ssub.s32 %s13, 1
      // Predicated region
      $region13: #{dgcnn_forward.1} parent=11 // pred_check
        %p206 = pneg %p60
      $region14: #{dgcnn_forward.1} parent=11 // pred_check_branch
        %208 = sbr.rel (%p206) target = $region16
      $region15: #{dgcnn_forward.1} parent=11 // pred_region
        _
      $region16: #{dgcnn_forward.1} parent=11 // pred_fallthru
        _
      // Predicated region
      $region17: #{dgcnn_forward.1} parent=11 // pred_check
        %p209 = pneg %p81
      $region18: #{dgcnn_forward.1} parent=11 // pred_check_branch
        %211 = sbr.rel (%p209) target = $region20
      $region19: #{dgcnn_forward.1} parent=11 // pred_region
        _
      $region20: #{dgcnn_forward.1} parent=11 // pred_fallthru
        _
      // Predicated region
      $region21: #{dgcnn_forward.1} parent=11 // pred_check
        %p212 = pneg %p102
      $region22: #{dgcnn_forward.1} parent=11 // pred_check_branch
        %214 = sbr.rel (%p212) target = $region24
      $region23: #{dgcnn_forward.1} parent=11 // pred_region
        _
      $region24: #{dgcnn_forward.1} parent=11 // pred_fallthru
        _
      // Predicated region
      $region25: #{dgcnn_forward.1} parent=11 // pred_check
        %p215 = pneg %p123
      $region26: #{dgcnn_forward.1} parent=11 // pred_check_branch
        %217 = sbr.rel (%p215) target = $region28
      $region27: #{dgcnn_forward.1} parent=11 // pred_region
        _
      $region28: #{dgcnn_forward.1} parent=11 // pred_fallthru
        _
      // Predicated region
      $region29: #{dgcnn_forward.1} parent=11 // pred_check
        %p218 = pneg %p144
      $region30: #{dgcnn_forward.1} parent=11 // pred_check_branch
        %220 = sbr.rel (%p218) target = $region32
      $region31: #{dgcnn_forward.1} parent=11 // pred_region
        _
      $region32: #{dgcnn_forward.1} parent=11 // pred_fallthru
        _
      // Predicated region
      $region33: #{dgcnn_forward.1} parent=11 // pred_check
        %p221 = pneg %p165
      $region34: #{dgcnn_forward.1} parent=11 // pred_check_branch
        %223 = sbr.rel (%p221) target = $region36
      $region35: #{dgcnn_forward.1} parent=11 // pred_region
        _
      $region36: #{dgcnn_forward.1} parent=11 // pred_fallthru
        _
    $region12: #{dgcnn_forward.1} parent=5 // pred_fallthru
      _
    %p224 = scmp.lt.s32.totalorder %s13, 2
    // Predicated region
    $region37: #{dgcnn_forward.1} parent=5 // pred_check
      %p225 = pneg %p224
    $region38: #{dgcnn_forward.1} parent=5 // pred_check_branch
      %227 = sbr.rel (%p225) target = $region40
    $region39: #{dgcnn_forward.1} parent=5 // pred_region
      // Predicated region
      $region41: #{dgcnn_forward.1} parent=39 // pred_check
        %p228 = pneg %p33
      $region42: #{dgcnn_forward.1} parent=39 // pred_check_branch
        %230 = sbr.rel (%p228) target = $region44
      $region43: #{dgcnn_forward.1} parent=39 // pred_region
        %p231 = scmp.lt.s32.totalorder %s13, 1
        %s232 = scalar_select %p231, %s13, 1
        %s233 = smul.addr %s232, 8
        %s234 = scalar_lea.vmem %s0, %s233
      $region44: #{dgcnn_forward.1} parent=39 // pred_fallthru
        _
    $region40: #{dgcnn_forward.1} parent=5 // pred_fallthru
      _
    %p235 = scmp.le.s32.totalorder 1, %s13
    %p236 = scmp.lt.s32.totalorder %s13, 3
    %p237 = pnand %p235, %p236
    %p238 = pneg %p237
    // Predicated region
    $region45: #{dgcnn_forward.1} parent=5 // pred_check
      _
    $region46: #{dgcnn_forward.1} parent=5 // pred_check_branch
      %240 = sbr.rel (%p237) target = $region48
    $region47: #{dgcnn_forward.1} parent=5 // pred_region
      %s241 = ssub.s32 %s13, 1
      %p242 = scmp.lt.s32.totalorder %s18, 1
      %s243 = scalar_select %p242, %s18, 1
      %s244 = smul.addr %s243, 8
      %s245 = scalar_lea.vmem %s0, %s244
      %p246 = pneg %p39
      %p247 = pneg %p36
      %p248 = pneg %p60
      %p249 = pneg %p57
      %p250 = pneg %p81
      %p251 = pneg %p78
      %p252 = pneg %p102
      %p253 = pneg %p99
      %p254 = pneg %p123
      %p255 = pneg %p120
      %p256 = pneg %p144
      %p257 = pneg %p141
      %p258 = pneg %p165
      %p259 = pneg %p162
      %p260 = pneg %p191
      %p261 = pneg %p188
      %p262 = scmp.lt.s32.totalorder %s18, 1
      %s263 = scalar_select %p262, %s18, 1
      %s264 = smul.addr %s263, 8
      %s265 = scalar_lea.vmem %s7, %s264
      %p266 = scmp.lt.s32.totalorder %s18, 1
      %s267 = scalar_select %p266, %s18, 1
      %s268 = smul.addr %s267, 8
      %s269 = scalar_lea.vmem %s0, %s268
      %p270 = scmp.lt.s32.totalorder %s18, 1
      %s271 = scalar_select %p270, %s18, 1
      %s272 = smul.addr %s271, 8
      %s273 = scalar_lea.vmem %s7, %s272
      %v274 = vld [vmem:[%s269] sm:$0xff]
      %v275 = vld [vmem:[%s1] sm:$0xff]
      %v276 = vld [vmem:[%s1 + $0x8] sm:$0xff]
      %v277 = vld [vmem:[%s1 + $0x10] sm:$0xff]
      %v278 = vld [vmem:[%s1 + $0x18] sm:$0xff]
      %v279 = vld [vmem:[%s1 + $0x20] sm:$0xff]
      %v280 = vld [vmem:[%s1 + $0x28] sm:$0xff]
      %v281 = vld [vmem:[%s1 + $0x30] sm:$0xff]
      %v282 = vld [vmem:[%s1 + $0x38] sm:$0xff]
      %v283 = vld [vmem:[%s1 + $0x40] sm:$0xff]
      %v284 = vld [vmem:[%s1 + $0x48] sm:$0xff]
      %v285 = vld [vmem:[%s1 + $0x50] sm:$0xff]
      %v286 = vld [vmem:[%s1 + $0x58] sm:$0xff]
      %v287 = vld [vmem:[%s1 + $0x60] sm:$0xff]
      %v288 = vld [vmem:[%s1 + $0x68] sm:$0xff]
      %v289 = vld [vmem:[%s1 + $0x70] sm:$0xff]
      %v290 = vld [vmem:[%s1 + $0x78] sm:$0xff]
      %v291 = vld [vmem:[%s1 + $0x80] sm:$0xff]
      %v292 = vld [vmem:[%s1 + $0x88] sm:$0xff]
      %v293 = vld [vmem:[%s1 + $0x90] sm:$0xff]
      %v294 = vld [vmem:[%s1 + $0x98] sm:$0xff]
      %v295 = vld [vmem:[%s1 + $0xa0] sm:$0xff]
      %v296 = vld [vmem:[%s1 + $0xa8] sm:$0xff]
      %v297 = vld [vmem:[%s1 + $0xb0] sm:$0xff]
      %v298 = vld [vmem:[%s1 + $0xb8] sm:$0xff]
      %v299 = vld [vmem:[%s1 + $0xc0] sm:$0xff]
      %v300 = vld [vmem:[%s1 + $0xc8] sm:$0xff]
      %v301 = vld [vmem:[%s1 + $0xd0] sm:$0xff]
      %v302 = vld [vmem:[%s1 + $0xd8] sm:$0xff]
      %v303 = vld [vmem:[%s1 + $0xe0] sm:$0xff]
      %v304 = vld [vmem:[%s1 + $0xe8] sm:$0xff]
      %v305 = vld [vmem:[%s1 + $0xf0] sm:$0xff]
      %v306 = vld [vmem:[%s1 + $0xf8] sm:$0xff]
      %v307 = vld [vmem:[%s1 + $0x100] sm:$0xff]
      %v308 = vld [vmem:[%s1 + $0x108] sm:$0xff]
      %v309 = vld [vmem:[%s1 + $0x110] sm:$0xff]
      %v310 = vld [vmem:[%s1 + $0x118] sm:$0xff]
      %v311 = vld [vmem:[%s1 + $0x120] sm:$0xff]
      %v312 = vld [vmem:[%s1 + $0x128] sm:$0xff]
      %v313 = vld [vmem:[%s1 + $0x130] sm:$0xff]
      %v314 = vld [vmem:[%s1 + $0x138] sm:$0xff]
      %v315 = vld [vmem:[%s1 + $0x140] sm:$0xff]
      %v316 = vld [vmem:[%s1 + $0x148] sm:$0xff]
      %v317 = vld [vmem:[%s1 + $0x150] sm:$0xff]
      %v318 = vld [vmem:[%s1 + $0x158] sm:$0xff]
      %v319 = vld [vmem:[%s1 + $0x160] sm:$0xff]
      %v320 = vld [vmem:[%s1 + $0x168] sm:$0xff]
      %v321 = vld [vmem:[%s1 + $0x170] sm:$0xff]
      %v322 = vld [vmem:[%s1 + $0x178] sm:$0xff]
      %v323 = vld [vmem:[%s1 + $0x180] sm:$0xff]
      %v324 = vld [vmem:[%s1 + $0x188] sm:$0xff]
      %v325 = vld [vmem:[%s1 + $0x190] sm:$0xff]
      %v326 = vld [vmem:[%s1 + $0x198] sm:$0xff]
      %v327 = vld [vmem:[%s1 + $0x1a0] sm:$0xff]
      %v328 = vld [vmem:[%s1 + $0x1a8] sm:$0xff]
      %v329 = vld [vmem:[%s1 + $0x1b0] sm:$0xff]
      %v330 = vld [vmem:[%s1 + $0x1b8] sm:$0xff]
      %v331 = vld [vmem:[%s1 + $0x1c0] sm:$0xff]
      %v332 = vld [vmem:[%s1 + $0x1c8] sm:$0xff]
      %v333 = vld [vmem:[%s1 + $0x1d0] sm:$0xff]
      %v334 = vld [vmem:[%s1 + $0x1d8] sm:$0xff]
      %v335 = vld [vmem:[%s1 + $0x1e0] sm:$0xff]
      %v336 = vld [vmem:[%s1 + $0x1e8] sm:$0xff]
      %v337 = vld [vmem:[%s1 + $0x1f0] sm:$0xff]
      %v338 = vld [vmem:[%s1 + $0x1f8] sm:$0xff]
      %v339 = vld [vmem:[%s2] sm:$0xf]
      %v341 = vlaneseq
      %v342 = vshrl.u32 %v341, 7
      %v343 = vsub.s32 0, %v342
      %v344 = vrot.slane %v339, %v343
      %v345 = vlaneseq
      %v346 = vshrl.u32 %v345, 7
      %v347 = vsub.s32 1, %v346
      %v348 = vrot.slane %v339, %v347
      %v349 = vlaneseq
      %v350 = vshrl.u32 %v349, 7
      %v351 = vsub.s32 2, %v350
      %v352 = vrot.slane %v339, %v351
      %v353 = vlaneseq
      %v354 = vshrl.u32 %v353, 7
      %v355 = vsub.s32 3, %v354
      %v356 = vrot.slane %v339, %v355
      %361 = vmatprep.subr.mxu0 %v336
      %362 = vmatpush1.msra.mxu0 %v335
      %363 = vmatprep.subr.mxu0 %v332
      %364 = vmatpush1.msra.mxu0 %v331
      %365 = vmatprep.subr.mxu0 %v328
      %366 = vmatpush1.msra.mxu0 %v327
      %367 = vmatprep.subr.mxu0 %v324
      %368 = vmatpush1.msra.mxu0 %v323
      %369 = vmatprep.subr.mxu0 %v320
      %370 = vmatpush1.msra.mxu0 %v319
      %371 = vmatprep.subr.mxu0 %v316
      %372 = vmatpush1.msra.mxu0 %v315
      %373 = vmatprep.subr.mxu0 %v312
      %374 = vmatpush1.msra.mxu0 %v311
      %375 = vmatprep.subr.mxu0 %v308
      %376 = vmatpush1.msra.mxu0 %v307
      %377 = vmatprep.subr.mxu0 %v304
      %378 = vmatpush1.msra.mxu0 %v303
      %379 = vmatprep.subr.mxu0 %v300
      %380 = vmatpush1.msra.mxu0 %v299
      %381 = vmatprep.subr.mxu0 %v296
      %382 = vmatpush1.msra.mxu0 %v295
      %383 = vmatprep.subr.mxu0 %v292
      %384 = vmatpush1.msra.mxu0 %v291
      %385 = vmatprep.subr.mxu0 %v288
      %386 = vmatpush1.msra.mxu0 %v287
      %387 = vmatprep.subr.mxu0 %v284
      %388 = vmatpush1.msra.mxu0 %v283
      %389 = vmatprep.subr.mxu0 %v280
      %390 = vmatpush1.msra.mxu0 %v279
      %391 = vmatprep.subr.mxu0 %v276
      %392 = vmatpush1.msra.mxu0 %v275
      %393 = vmatprep.subr.mxu0 0.0
      %394 = vmatpush2.msra.mxu0 0.0
      %395 = vmatprep.subr.mxu0 0.0
      %396 = vmatpush2.msra.mxu0 0.0
      %397 = vmatprep.subr.mxu0 0.0
      %398 = vmatpush2.msra.mxu0 0.0
      %399 = vmatprep.subr.mxu0 0.0
      %400 = vmatpush2.msra.mxu0 0.0
      %401 = vmatprep.subr.mxu0 0.0
      %402 = vmatpush2.msra.mxu0 0.0
      %403 = vmatprep.subr.mxu0 0.0
      %404 = vmatpush2.msra.mxu0 0.0
      %405 = vmatprep.subr.mxu0 0.0
      %406 = vmatpush2.msra.mxu0 0.0
      %407 = vmatprep.subr.mxu0 0.0
      %408 = vmatpush2.msra.mxu0 0.0
      %409 = vmatprep.subr.mxu0 0.0
      %410 = vmatpush2.msra.mxu0 0.0
      %411 = vmatprep.subr.mxu0 0.0
      %412 = vmatpush2.msra.mxu0 0.0
      %413 = vmatprep.subr.mxu0 0.0
      %414 = vmatpush2.msra.mxu0 0.0
      %415 = vmatprep.subr.mxu0 0.0
      %416 = vmatpush2.msra.mxu0 0.0
      %417 = vmatprep.subr.mxu0 0.0
      %418 = vmatpush2.msra.mxu0 0.0
      %419 = vmatprep.subr.mxu0 0.0
      %420 = vmatpush2.msra.mxu0 0.0
      %421 = vmatprep.subr.mxu0 0.0
      %422 = vmatpush2.msra.mxu0 0.0
      %423 = vmatprep.subr.mxu0 0.0
      %424 = vmatpush2.msra.mxu0 0.0
      %425 = vmatprep.mubr.f32.mxu0 0.0
      %426 = vmatmul.mubr.f32.gmra.mxu0 %v274
      %v427 = vpop.f32.mrf.mxu0
      %v428 = vadd.f32 %v344, %v427
      %v429 = vpop.f32.mrf.mxu0
      %v430 = vadd.f32 %v348, %v429
      %431 = vdwg.mxu0
      %432 = vmatprep.subr.mxu0 %v338
      %433 = vmatpush1.msra.mxu0 %v337
      %434 = vmatprep.subr.mxu0 %v334
      %435 = vmatpush1.msra.mxu0 %v333
      %436 = vmatprep.subr.mxu0 %v330
      %437 = vmatpush1.msra.mxu0 %v329
      %438 = vmatprep.subr.mxu0 %v326
      %439 = vmatpush1.msra.mxu0 %v325
      %440 = vmatprep.subr.mxu0 %v322
      %441 = vmatpush1.msra.mxu0 %v321
      %442 = vmatprep.subr.mxu0 %v318
      %443 = vmatpush1.msra.mxu0 %v317
      %444 = vmatprep.subr.mxu0 %v314
      %445 = vmatpush1.msra.mxu0 %v313
      %446 = vmatprep.subr.mxu0 %v310
      %447 = vmatpush1.msra.mxu0 %v309
      %448 = vmatprep.subr.mxu0 %v306
      %449 = vmatpush1.msra.mxu0 %v305
      %450 = vmatprep.subr.mxu0 %v302
      %451 = vmatpush1.msra.mxu0 %v301
      %452 = vmatprep.subr.mxu0 %v298
      %453 = vmatpush1.msra.mxu0 %v297
      %454 = vmatprep.subr.mxu0 %v294
      %455 = vmatpush1.msra.mxu0 %v293
      %456 = vmatprep.subr.mxu0 %v290
      %457 = vmatpush1.msra.mxu0 %v289
      %458 = vmatprep.subr.mxu0 %v286
      %459 = vmatpush1.msra.mxu0 %v285
      %460 = vmatprep.subr.mxu0 %v282
      %461 = vmatpush1.msra.mxu0 %v281
      %462 = vmatprep.subr.mxu0 %v278
      %463 = vmatpush1.msra.mxu0 %v277
      %464 = vmatprep.subr.mxu0 0.0
      %465 = vmatpush2.msra.mxu0 0.0
      %466 = vmatprep.subr.mxu0 0.0
      %467 = vmatpush2.msra.mxu0 0.0
      %468 = vmatprep.subr.mxu0 0.0
      %469 = vmatpush2.msra.mxu0 0.0
      %470 = vmatprep.subr.mxu0 0.0
      %471 = vmatpush2.msra.mxu0 0.0
      %472 = vmatprep.subr.mxu0 0.0
      %473 = vmatpush2.msra.mxu0 0.0
      %474 = vmatprep.subr.mxu0 0.0
      %475 = vmatpush2.msra.mxu0 0.0
      %476 = vmatprep.subr.mxu0 0.0
      %477 = vmatpush2.msra.mxu0 0.0
      %478 = vmatprep.subr.mxu0 0.0
      %479 = vmatpush2.msra.mxu0 0.0
      %480 = vmatprep.subr.mxu0 0.0
      %481 = vmatpush2.msra.mxu0 0.0
      %482 = vmatprep.subr.mxu0 0.0
      %483 = vmatpush2.msra.mxu0 0.0
      %484 = vmatprep.subr.mxu0 0.0
      %485 = vmatpush2.msra.mxu0 0.0
      %486 = vmatprep.subr.mxu0 0.0
      %487 = vmatpush2.msra.mxu0 0.0
      %488 = vmatprep.subr.mxu0 0.0
      %489 = vmatpush2.msra.mxu0 0.0
      %490 = vmatprep.subr.mxu0 0.0
      %491 = vmatpush2.msra.mxu0 0.0
      %492 = vmatprep.subr.mxu0 0.0
      %493 = vmatpush2.msra.mxu0 0.0
      %494 = vmatprep.subr.mxu0 0.0
      %495 = vmatpush2.msra.mxu0 0.0
      %496 = vmatprep.mubr.f32.mxu0 0.0
      %497 = vmatmul.mubr.f32.gmra.mxu0 %v274
      %v498 = vpop.f32.mrf.mxu0
      %v499 = vadd.f32 %v352, %v498
      %v500 = vpop.f32.mrf.mxu0
      %v501 = vadd.f32 %v356, %v500
      %502 = vdwg.mxu0
      %v503 = vmax.f32 %v428, 0.0
      %v504 = vmax.f32 %v430, 0.0
      %v505 = vmax.f32 %v499, 0.0
      %v506 = vmax.f32 %v501, 0.0
      %v507 = vld [vmem:[%s3] sm:$0xff]
      %v508 = vld [vmem:[%s3 + $0x8] sm:$0xff]
      %v509 = vld [vmem:[%s3 + $0x10] sm:$0xff]
      %v510 = vld [vmem:[%s3 + $0x18] sm:$0xff]
      %v511 = vld [vmem:[%s3 + $0x20] sm:$0xff]
      %v512 = vld [vmem:[%s3 + $0x28] sm:$0xff]
      %v513 = vld [vmem:[%s3 + $0x30] sm:$0xff]
      %v514 = vld [vmem:[%s3 + $0x38] sm:$0xff]
      %v515 = vld [vmem:[%s3 + $0x40] sm:$0xff]
      %v516 = vld [vmem:[%s3 + $0x48] sm:$0xff]
      %v517 = vld [vmem:[%s3 + $0x50] sm:$0xff]
      %v518 = vld [vmem:[%s3 + $0x58] sm:$0xff]
      %v519 = vld [vmem:[%s3 + $0x60] sm:$0xff]
      %v520 = vld [vmem:[%s3 + $0x68] sm:$0xff]
      %v521 = vld [vmem:[%s3 + $0x70] sm:$0xff]
      %v522 = vld [vmem:[%s3 + $0x78] sm:$0xff]
      %v523 = vld [vmem:[%s3 + $0x80] sm:$0xff]
      %v524 = vld [vmem:[%s3 + $0x88] sm:$0xff]
      %v525 = vld [vmem:[%s3 + $0x90] sm:$0xff]
      %v526 = vld [vmem:[%s3 + $0x98] sm:$0xff]
      %v527 = vld [vmem:[%s3 + $0xa0] sm:$0xff]
      %v528 = vld [vmem:[%s3 + $0xa8] sm:$0xff]
      %v529 = vld [vmem:[%s3 + $0xb0] sm:$0xff]
      %v530 = vld [vmem:[%s3 + $0xb8] sm:$0xff]
      %v531 = vld [vmem:[%s3 + $0xc0] sm:$0xff]
      %v532 = vld [vmem:[%s3 + $0xc8] sm:$0xff]
      %v533 = vld [vmem:[%s3 + $0xd0] sm:$0xff]
      %v534 = vld [vmem:[%s3 + $0xd8] sm:$0xff]
      %v535 = vld [vmem:[%s3 + $0xe0] sm:$0xff]
      %v536 = vld [vmem:[%s3 + $0xe8] sm:$0xff]
      %v537 = vld [vmem:[%s3 + $0xf0] sm:$0xff]
      %v538 = vld [vmem:[%s3 + $0xf8] sm:$0xff]
      %v539 = vld [vmem:[%s3 + $0x100] sm:$0xff]
      %v540 = vld [vmem:[%s3 + $0x108] sm:$0xff]
      %v541 = vld [vmem:[%s3 + $0x110] sm:$0xff]
      %v542 = vld [vmem:[%s3 + $0x118] sm:$0xff]
      %v543 = vld [vmem:[%s3 + $0x120] sm:$0xff]
      %v544 = vld [vmem:[%s3 + $0x128] sm:$0xff]
      %v545 = vld [vmem:[%s3 + $0x130] sm:$0xff]
      %v546 = vld [vmem:[%s3 + $0x138] sm:$0xff]
      %v547 = vld [vmem:[%s3 + $0x140] sm:$0xff]
      %v548 = vld [vmem:[%s3 + $0x148] sm:$0xff]
      %v549 = vld [vmem:[%s3 + $0x150] sm:$0xff]
      %v550 = vld [vmem:[%s3 + $0x158] sm:$0xff]
      %v551 = vld [vmem:[%s3 + $0x160] sm:$0xff]
      %v552 = vld [vmem:[%s3 + $0x168] sm:$0xff]
      %v553 = vld [vmem:[%s3 + $0x170] sm:$0xff]
      %v554 = vld [vmem:[%s3 + $0x178] sm:$0xff]
      %v555 = vld [vmem:[%s3 + $0x180] sm:$0xff]
      %v556 = vld [vmem:[%s3 + $0x188] sm:$0xff]
      %v557 = vld [vmem:[%s3 + $0x190] sm:$0xff]
      %v558 = vld [vmem:[%s3 + $0x198] sm:$0xff]
      %v559 = vld [vmem:[%s3 + $0x1a0] sm:$0xff]
      %v560 = vld [vmem:[%s3 + $0x1a8] sm:$0xff]
      %v561 = vld [vmem:[%s3 + $0x1b0] sm:$0xff]
      %v562 = vld [vmem:[%s3 + $0x1b8] sm:$0xff]
      %v563 = vld [vmem:[%s3 + $0x1c0] sm:$0xff]
      %v564 = vld [vmem:[%s3 + $0x1c8] sm:$0xff]
      %v565 = vld [vmem:[%s3 + $0x1d0] sm:$0xff]
      %v566 = vld [vmem:[%s3 + $0x1d8] sm:$0xff]
      %v567 = vld [vmem:[%s3 + $0x1e0] sm:$0xff]
      %v568 = vld [vmem:[%s3 + $0x1e8] sm:$0xff]
      %v569 = vld [vmem:[%s3 + $0x1f0] sm:$0xff]
      %v570 = vld [vmem:[%s3 + $0x1f8] sm:$0xff]
      %v571 = vld [vmem:[%s4] sm:$0x1]
      %v573 = vlaneseq
      %v574 = vshrl.u32 %v573, 7
      %v575 = vsub.s32 0, %v574
      %v576 = vrot.slane %v571, %v575
      %578 = vmatprep.subr.mxu0 0.0
      %579 = vmatpush1.msra.mxu0 %v522
      %580 = vmatprep.subr.mxu0 0.0
      %581 = vmatpush1.msra.mxu0 %v521
      %582 = vmatprep.subr.mxu0 0.0
      %583 = vmatpush1.msra.mxu0 %v520
      %584 = vmatprep.subr.mxu0 0.0
      %585 = vmatpush1.msra.mxu0 %v519
      %586 = vmatprep.subr.mxu0 0.0
      %587 = vmatpush1.msra.mxu0 %v518
      %588 = vmatprep.subr.mxu0 0.0
      %589 = vmatpush1.msra.mxu0 %v517
      %590 = vmatprep.subr.mxu0 0.0
      %591 = vmatpush1.msra.mxu0 %v516
      %592 = vmatprep.subr.mxu0 0.0
      %593 = vmatpush1.msra.mxu0 %v515
      %594 = vmatprep.subr.mxu0 0.0
      %595 = vmatpush1.msra.mxu0 %v514
      %596 = vmatprep.subr.mxu0 0.0
      %597 = vmatpush1.msra.mxu0 %v513
      %598 = vmatprep.subr.mxu0 0.0
      %599 = vmatpush1.msra.mxu0 %v512
      %600 = vmatprep.subr.mxu0 0.0
      %601 = vmatpush1.msra.mxu0 %v511
      %602 = vmatprep.subr.mxu0 0.0
      %603 = vmatpush1.msra.mxu0 %v510
      %604 = vmatprep.subr.mxu0 0.0
      %605 = vmatpush1.msra.mxu0 %v509
      %606 = vmatprep.subr.mxu0 0.0
      %607 = vmatpush1.msra.mxu0 %v508
      %608 = vmatprep.subr.mxu0 0.0
      %609 = vmatpush1.msra.mxu0 %v507
      %610 = vmatprep.subr.mxu0 0.0
      %611 = vmatpush2.msra.mxu0 %v538
      %612 = vmatprep.subr.mxu0 0.0
      %613 = vmatpush2.msra.mxu0 %v537
      %614 = vmatprep.subr.mxu0 0.0
      %615 = vmatpush2.msra.mxu0 %v536
      %616 = vmatprep.subr.mxu0 0.0
      %617 = vmatpush2.msra.mxu0 %v535
      %618 = vmatprep.subr.mxu0 0.0
      %619 = vmatpush2.msra.mxu0 %v534
      %620 = vmatprep.subr.mxu0 0.0
      %621 = vmatpush2.msra.mxu0 %v533
      %622 = vmatprep.subr.mxu0 0.0
      %623 = vmatpush2.msra.mxu0 %v532
      %624 = vmatprep.subr.mxu0 0.0
      %625 = vmatpush2.msra.mxu0 %v531
      %626 = vmatprep.subr.mxu0 0.0
      %627 = vmatpush2.msra.mxu0 %v530
      %628 = vmatprep.subr.mxu0 0.0
      %629 = vmatpush2.msra.mxu0 %v529
      %630 = vmatprep.subr.mxu0 0.0
      %631 = vmatpush2.msra.mxu0 %v528
      %632 = vmatprep.subr.mxu0 0.0
      %633 = vmatpush2.msra.mxu0 %v527
      %634 = vmatprep.subr.mxu0 0.0
      %635 = vmatpush2.msra.mxu0 %v526
      %636 = vmatprep.subr.mxu0 0.0
      %637 = vmatpush2.msra.mxu0 %v525
      %638 = vmatprep.subr.mxu0 0.0
      %639 = vmatpush2.msra.mxu0 %v524
      %640 = vmatprep.subr.mxu0 0.0
      %641 = vmatpush2.msra.mxu0 %v523
      %642 = vmatprep.mubr.f32.mxu0 %v504
      %643 = vmatmul.mubr.f32.gmra.mxu0 %v503
      %v644 = vpop.f32.mrf.mxu0
      %v645 = vadd.f32 %v576, %v644
      %v646 = vpop.f32.mrf.mxu0
      %647 = vdwg.mxu0
      %648 = vmatprep.subr.mxu0 0.0
      %649 = vmatpush1.msra.mxu0 %v554
      %650 = vmatprep.subr.mxu0 0.0
      %651 = vmatpush1.msra.mxu0 %v553
      %652 = vmatprep.subr.mxu0 0.0
      %653 = vmatpush1.msra.mxu0 %v552
      %654 = vmatprep.subr.mxu0 0.0
      %655 = vmatpush1.msra.mxu0 %v551
      %656 = vmatprep.subr.mxu0 0.0
      %657 = vmatpush1.msra.mxu0 %v550
      %658 = vmatprep.subr.mxu0 0.0
      %659 = vmatpush1.msra.mxu0 %v549
      %660 = vmatprep.subr.mxu0 0.0
      %661 = vmatpush1.msra.mxu0 %v548
      %662 = vmatprep.subr.mxu0 0.0
      %663 = vmatpush1.msra.mxu0 %v547
      %664 = vmatprep.subr.mxu0 0.0
      %665 = vmatpush1.msra.mxu0 %v546
      %666 = vmatprep.subr.mxu0 0.0
      %667 = vmatpush1.msra.mxu0 %v545
      %668 = vmatprep.subr.mxu0 0.0
      %669 = vmatpush1.msra.mxu0 %v544
      %670 = vmatprep.subr.mxu0 0.0
      %671 = vmatpush1.msra.mxu0 %v543
      %672 = vmatprep.subr.mxu0 0.0
      %673 = vmatpush1.msra.mxu0 %v542
      %674 = vmatprep.subr.mxu0 0.0
      %675 = vmatpush1.msra.mxu0 %v541
      %676 = vmatprep.subr.mxu0 0.0
      %677 = vmatpush1.msra.mxu0 %v540
      %678 = vmatprep.subr.mxu0 0.0
      %679 = vmatpush1.msra.mxu0 %v539
      %680 = vmatprep.subr.mxu0 0.0
      %681 = vmatpush2.msra.mxu0 %v570
      %682 = vmatprep.subr.mxu0 0.0
      %683 = vmatpush2.msra.mxu0 %v569
      %684 = vmatprep.subr.mxu0 0.0
      %685 = vmatpush2.msra.mxu0 %v568
      %686 = vmatprep.subr.mxu0 0.0
      %687 = vmatpush2.msra.mxu0 %v567
      %688 = vmatprep.subr.mxu0 0.0
      %689 = vmatpush2.msra.mxu0 %v566
      %690 = vmatprep.subr.mxu0 0.0
      %691 = vmatpush2.msra.mxu0 %v565
      %692 = vmatprep.subr.mxu0 0.0
      %693 = vmatpush2.msra.mxu0 %v564
      %694 = vmatprep.subr.mxu0 0.0
      %695 = vmatpush2.msra.mxu0 %v563
      %696 = vmatprep.subr.mxu0 0.0
      %697 = vmatpush2.msra.mxu0 %v562
      %698 = vmatprep.subr.mxu0 0.0
      %699 = vmatpush2.msra.mxu0 %v561
      %700 = vmatprep.subr.mxu0 0.0
      %701 = vmatpush2.msra.mxu0 %v560
      %702 = vmatprep.subr.mxu0 0.0
      %703 = vmatpush2.msra.mxu0 %v559
      %704 = vmatprep.subr.mxu0 0.0
      %705 = vmatpush2.msra.mxu0 %v558
      %706 = vmatprep.subr.mxu0 0.0
      %707 = vmatpush2.msra.mxu0 %v557
      %708 = vmatprep.subr.mxu0 0.0
      %709 = vmatpush2.msra.mxu0 %v556
      %710 = vmatprep.subr.mxu0 0.0
      %711 = vmatpush2.msra.mxu0 %v555
      %712 = vmatprep.mubr.f32.mxu0 %v506
      %713 = vmatmul.mubr.f32.gmra.mxu0 %v505
      %v714 = vpop.f32.mrf.mxu0
      %v715 = vadd.f32 %v645, %v714
      %v716 = vpop.f32.mrf.mxu0
      %717 = vdwg.mxu0
      %v718 = vmax.f32 %v715, 0.0
      %v719 = vld [vmem:[%s5] sm:$0xff]
      %v720 = vld [vmem:[%s5 + $0x8] sm:$0xff]
      %v721 = vld [vmem:[%s5 + $0x10] sm:$0xff]
      %v722 = vld [vmem:[%s5 + $0x18] sm:$0xff]
      %v723 = vld [vmem:[%s5 + $0x20] sm:$0xff]
      %v724 = vld [vmem:[%s5 + $0x28] sm:$0xff]
      %v725 = vld [vmem:[%s5 + $0x30] sm:$0xff]
      %v726 = vld [vmem:[%s5 + $0x38] sm:$0xff]
      %v727 = vld [vmem:[%s5 + $0x40] sm:$0xff]
      %v728 = vld [vmem:[%s5 + $0x48] sm:$0xff]
      %v729 = vld [vmem:[%s5 + $0x50] sm:$0xff]
      %v730 = vld [vmem:[%s5 + $0x58] sm:$0xff]
      %v731 = vld [vmem:[%s5 + $0x60] sm:$0xff]
      %v732 = vld [vmem:[%s5 + $0x68] sm:$0xff]
      %v733 = vld [vmem:[%s5 + $0x70] sm:$0xff]
      %v734 = vld [vmem:[%s5 + $0x78] sm:$0xff]
      %v735 = vld [vmem:[%s6] sm:$0x1]
      %v737 = vlaneseq
      %v738 = vshrl.u32 %v737, 7
      %v739 = vsub.s32 0, %v738
      %v740 = vrot.slane %v735, %v739
      %742 = vmatprep.subr.mxu0 0.0
      %743 = vmatpush1.msra.mxu0 %v734
      %744 = vmatprep.subr.mxu0 0.0
      %745 = vmatpush1.msra.mxu0 %v733
      %746 = vmatprep.subr.mxu0 0.0
      %747 = vmatpush1.msra.mxu0 %v732
      %748 = vmatprep.subr.mxu0 0.0
      %749 = vmatpush1.msra.mxu0 %v731
      %750 = vmatprep.subr.mxu0 0.0
      %751 = vmatpush1.msra.mxu0 %v730
      %752 = vmatprep.subr.mxu0 0.0
      %753 = vmatpush1.msra.mxu0 %v729
      %754 = vmatprep.subr.mxu0 0.0
      %755 = vmatpush1.msra.mxu0 %v728
      %756 = vmatprep.subr.mxu0 0.0
      %757 = vmatpush1.msra.mxu0 %v727
      %758 = vmatprep.subr.mxu0 0.0
      %759 = vmatpush1.msra.mxu0 %v726
      %760 = vmatprep.subr.mxu0 0.0
      %761 = vmatpush1.msra.mxu0 %v725
      %762 = vmatprep.subr.mxu0 0.0
      %763 = vmatpush1.msra.mxu0 %v724
      %764 = vmatprep.subr.mxu0 0.0
      %765 = vmatpush1.msra.mxu0 %v723
      %766 = vmatprep.subr.mxu0 0.0
      %767 = vmatpush1.msra.mxu0 %v722
      %768 = vmatprep.subr.mxu0 0.0
      %769 = vmatpush1.msra.mxu0 %v721
      %770 = vmatprep.subr.mxu0 0.0
      %771 = vmatpush1.msra.mxu0 %v720
      %772 = vmatprep.subr.mxu0 0.0
      %773 = vmatpush1.msra.mxu0 %v719
      %774 = vmatprep.subr.mxu0 0.0
      %775 = vmatpush2.msra.mxu0 0.0
      %776 = vmatprep.subr.mxu0 0.0
      %777 = vmatpush2.msra.mxu0 0.0
      %778 = vmatprep.subr.mxu0 0.0
      %779 = vmatpush2.msra.mxu0 0.0
      %780 = vmatprep.subr.mxu0 0.0
      %781 = vmatpush2.msra.mxu0 0.0
      %782 = vmatprep.subr.mxu0 0.0
      %783 = vmatpush2.msra.mxu0 0.0
      %784 = vmatprep.subr.mxu0 0.0
      %785 = vmatpush2.msra.mxu0 0.0
      %786 = vmatprep.subr.mxu0 0.0
      %787 = vmatpush2.msra.mxu0 0.0
      %788 = vmatprep.subr.mxu0 0.0
      %789 = vmatpush2.msra.mxu0 0.0
      %790 = vmatprep.subr.mxu0 0.0
      %791 = vmatpush2.msra.mxu0 0.0
      %792 = vmatprep.subr.mxu0 0.0
      %793 = vmatpush2.msra.mxu0 0.0
      %794 = vmatprep.subr.mxu0 0.0
      %795 = vmatpush2.msra.mxu0 0.0
      %796 = vmatprep.subr.mxu0 0.0
      %797 = vmatpush2.msra.mxu0 0.0
      %798 = vmatprep.subr.mxu0 0.0
      %799 = vmatpush2.msra.mxu0 0.0
      %800 = vmatprep.subr.mxu0 0.0
      %801 = vmatpush2.msra.mxu0 0.0
      %802 = vmatprep.subr.mxu0 0.0
      %803 = vmatpush2.msra.mxu0 0.0
      %804 = vmatprep.subr.mxu0 0.0
      %805 = vmatpush2.msra.mxu0 0.0
      %806 = vmatprep.mubr.f32.mxu0 0.0
      %807 = vmatmul.mubr.f32.gmra.mxu0 %v718
      %v808 = vpop.f32.mrf.mxu0
      %v809 = vadd.f32 %v740, %v808
      %v810 = vpop.f32.mrf.mxu0
      %811 = vdwg.mxu0
      %812 = vst [vmem:[%s273] sm:$0xff] %v809
      %p813 = scmp.lt.s32.totalorder %s18, 1
      %s814 = scalar_select %p813, %s18, 1
      %s815 = smul.addr %s814, 8
      %s816 = scalar_lea.vmem %s7, %s815
      // Predicated region
      $region49: #{dgcnn_forward.1} parent=47 // pred_check
        %p817 = pneg %p188
      $region50: #{dgcnn_forward.1} parent=47 // pred_check_branch
        %819 = sbr.rel (%p817) target = $region52
      $region51: #{dgcnn_forward.1} parent=47 // pred_region
        _
      $region52: #{dgcnn_forward.1} parent=47 // pred_fallthru
        _
    $region48: #{dgcnn_forward.1} parent=5 // pred_fallthru
      _
    %p820 = scmp.le.s32.totalorder 2, %s13
    // Predicated region
    $region53: #{dgcnn_forward.1} parent=5 // pred_check
      %p821 = pneg %p820
    $region54: #{dgcnn_forward.1} parent=5 // pred_check_branch
      %823 = sbr.rel (%p821) target = $region56
    $region55: #{dgcnn_forward.1} parent=5 // pred_region
      %s824 = ssub.s32 %s13, 2
      // Predicated region
      $region57: #{dgcnn_forward.1} parent=55 // pred_check
        %p825 = pneg %p194
      $region58: #{dgcnn_forward.1} parent=55 // pred_check_branch
        %827 = sbr.rel (%p825) target = $region60
      $region59: #{dgcnn_forward.1} parent=55 // pred_region
        %p828 = scmp.lt.s32.totalorder %s19, 1
        %s829 = scalar_select %p828, %s19, 1
        %s830 = smul.addr %s829, 8
        %s831 = scalar_lea.vmem %s7, %s830
      $region60: #{dgcnn_forward.1} parent=55 // pred_fallthru
        _
    $region56: #{dgcnn_forward.1} parent=5 // pred_fallthru
      _
  $region6: #{dgcnn_forward.1} parent=0 // loop_footer
    %s17 = sadd.s32 1, %s13
  $region7: #{dgcnn_forward.1} parent=0 // loop_footer_branch
    %12 = sbr.rel target = $region3
  $region8: #{dgcnn_forward.1} parent=0 // loop_exit
    _

</llo_original>
